<compile_context>
chip_gen: v7x
topology: tpu7x:2x2x1
jax: 0.10.0
libtpu: 0.0.40
codegen_flags: <defaults>
</compile_context>

<pallas_src>
import functools

import jax
import jax.numpy as jnp
from jax.experimental import pallas as pl
from jax.experimental.pallas import tpu as pltpu


def _round_up(n, m):
    return ((n + m - 1) // m) * m


def _cnn_text_kernel(half, narrow, x_ref, w_ref, b_ref, fcw_ref, fcb_ref, o_ref):
    """Fused conv1d(pad=1) -> relu -> global max_pool -> cat -> fc -> sigmoid."""
    # In-kernel f32 -> bf16 cast (cheap VPU op hidden under DMA/MXU); x makes a
    # single f32 pass over HBM instead of an extra wrapper-side astype+pad pass.
    x = x_ref[...].astype(jnp.bfloat16)
    # Single lane-dense MXU matmul covering every useful conv tap of every branch.
    r = jnp.dot(x, w_ref[...], preferred_element_type=jnp.float32)
    r = jnp.maximum(r + b_ref[...], 0.0)                # bias + relu, f32 epilogue
    if narrow:
        # Both taps live in one 128-lane vreg: max-pool == elementwise max against
        # the 64-lane rotation (one XLU op per vreg; XLU slot has slack).
        pooled = jnp.maximum(r, pltpu.roll(r, 64, axis=1))
    else:
        # Taps live in two vreg-aligned halves of width `half` (multiple of 128).
        pooled = jnp.maximum(r[:, :half], r[:, half:])
    # TODO(synk): dropout is inference-mode identity (no RNG mask), as in eval().
    # Final Linear(F*K -> 1): VPU multiply + lane reduction; fc bias from SMEM.
    # (fcw lanes beyond F*K are zero, so padded / duplicated lanes are ignored.)
    logit = jnp.sum(pooled * fcw_ref[...], axis=1, keepdims=True) + fcb_ref[0, 0]
    o_ref[...] = jax.nn.sigmoid(logit)


def _pack_params(conv_ws, conv_bs, fc_w, fc_b, kernel_sizes):
    """Pack every useful conv tap into one lane-dense bf16 MXU operand.

    conv_ws[i]: (F, E, ks_i) in PyTorch Conv1d layout; conv_bs[i]: (F,).
    Returns (w_pack (E, width), b_pack (1, width), fcw_pack (1, fc_width),
             fcb (1, 1), half, narrow, width).
    """
    num_filters, embed_dim, _ = conv_ws[0].shape
    n_branch = len(kernel_sizes)
    fk = num_filters * n_branch
    narrow = fk <= 64                      # both taps fit in one 128-lane vreg
    half = 64 if narrow else _round_up(fk, 128)
    width = 128 if narrow else 2 * half

    wa, wb, ba, bb = [], [], [], []
    zeros_w = jnp.zeros((embed_dim, num_filters), jnp.float32)
    for w, b, ks in zip(conv_ws, conv_bs, kernel_sizes):
        assert 1 <= ks <= 3, "length-1 input + padding=1 requires kernel_size <= 3"
        if ks == 1:      # positions: [relu(b), relu(x@w0+b), relu(b)]
            wa.append(w[:, :, 0].T); ba.append(b)
            wb.append(zeros_w);      bb.append(b)                  # bias-only padded position
        elif ks == 2:    # positions: [relu(x@w1+b), relu(x@w0+b)]
            wa.append(w[:, :, 1].T); ba.append(b)
            wb.append(w[:, :, 0].T); bb.append(b)
        else:            # ks == 3, single position: [relu(x@w1+b)]
            wa.append(w[:, :, 1].T); ba.append(b)
            wb.append(zeros_w);      bb.append(jnp.zeros_like(b))  # relu(0)=0 never wins the max

    def pad_cols(m, w_to):
        return jnp.pad(m, ((0, 0), (0, w_to - m.shape[1])))

    w_a = pad_cols(jnp.concatenate(wa, axis=1), half)
    w_b = pad_cols(jnp.concatenate(wb, axis=1), half)
    b_a = pad_cols(jnp.concatenate(ba)[None, :], half)
    b_b = pad_cols(jnp.concatenate(bb)[None, :], half)
    w_pack = jnp.concatenate([w_a, w_b], axis=1).astype(jnp.bfloat16)   # (E, width)
    b_pack = jnp.concatenate([b_a, b_b], axis=1).astype(jnp.float32)    # (1, width)

    fc_width = width if narrow else half
    fcw_pack = pad_cols(fc_w.reshape(1, -1).astype(jnp.float32), fc_width)
    fcb = fc_b.reshape(1, 1).astype(jnp.float32)
    return w_pack, b_pack, fcw_pack, fcb, half, narrow, width


def cnn_text_forward(x, conv_ws, conv_bs, fc_w, fc_b, kernel_sizes, *, block_m=4096):
    """x: (B, E) f32; conv_ws[i]: (F, E, ks_i); conv_bs[i]: (F,); fc_w: (1, F*K);
    fc_b: (1,).  Returns sigmoid probabilities of shape (B, 1), float32."""
    batch, embed_dim = x.shape
    w_pack, b_pack, fcw_pack, fcb, half, narrow, width = _pack_params(
        conv_ws, conv_bs, fc_w, fc_b, kernel_sizes)

    # Batch tiling: large tiles amortize the ~0.35 us/step grid overhead; for
    # mid-sized batches split into >=2 steps so both v7x TensorCores get work;
    # tiny batches run as a single full-array block.  No wrapper-side padding:
    # pl.cdiv grid + masked writeback handle the ragged tail.
    if batch > block_m:
        bm = block_m
    elif batch >= 2048:
        bm = _round_up(pl.cdiv(batch, 2), 8)
    else:
        bm = batch
    grid = (pl.cdiv(batch, bm),)

    return pl.pallas_call(
        functools.partial(_cnn_text_kernel, half, narrow),
        out_shape=jax.ShapeDtypeStruct((batch, 1), jnp.float32),
        grid=grid,
        in_specs=[
            pl.BlockSpec((bm, embed_dim), lambda i: (i, 0)),            # x batch tile (f32)
            pl.BlockSpec((embed_dim, width), lambda i: (0, 0)),         # packed conv taps (VMEM-resident)
            pl.BlockSpec((1, width), lambda i: (0, 0)),                 # packed conv bias
            pl.BlockSpec((1, fcw_pack.shape[1]), lambda i: (0, 0)),     # fc weight row
            pl.BlockSpec(memory_space=pltpu.MemorySpace.SMEM),          # fc bias scalar
        ],
        out_specs=pl.BlockSpec((bm, 1), lambda i: (i, 0)),
        compiler_params=pltpu.CompilerParams(
            dimension_semantics=("parallel",),
            # Headroom for big batch tiles; safe on v7x's 64 MiB/TC physical VMEM.
            vmem_limit_bytes=48 * 1024 * 1024),
    )(x, w_pack, b_pack, fcw_pack, fcb)


def cnn_text_reference(x, conv_ws, conv_bs, fc_w, fc_b, kernel_sizes):
    """Pure-JAX f32 reference mirroring the PyTorch forward (eval mode)."""
    xp = jnp.pad(x[:, :, None], ((0, 0), (0, 0), (1, 1)))    # (B, E, 3)
    pooled = []
    for w, b, ks in zip(conv_ws, conv_bs, kernel_sizes):      # w: (F, E, ks)
        l_out = 3 - ks + 1
        outs = [jnp.einsum("bcj,fcj->bf", xp[:, :, t:t + ks], w) + b
                for t in range(l_out)]
        conv_out = jax.nn.relu(jnp.stack(outs, axis=2))       # (B, F, L_out)
        pooled.append(jnp.max(conv_out, axis=2))
    feat = jnp.concatenate(pooled, axis=1)
    return jax.nn.sigmoid(feat @ fc_w.T + fc_b)


def _make_params(key, embedding_dim, num_filters, kernel_sizes):
    keys = jax.random.split(key, 2 * len(kernel_sizes) + 2)
    conv_ws, conv_bs = [], []
    for i, ks in enumerate(kernel_sizes):
        bound = 1.0 / (embedding_dim * ks) ** 0.5
        conv_ws.append(jax.random.uniform(
            keys[2 * i], (num_filters, embedding_dim, ks), jnp.float32, -bound, bound))
        conv_bs.append(jax.random.uniform(
            keys[2 * i + 1], (num_filters,), jnp.float32, -bound, bound))
    fan_in = num_filters * len(kernel_sizes)
    bound = 1.0 / fan_in ** 0.5
    fc_w = jax.random.uniform(keys[-2], (1, fan_in), jnp.float32, -bound, bound)
    fc_b = jax.random.uniform(keys[-1], (1,), jnp.float32, -bound, bound)
    return conv_ws, conv_bs, fc_w, fc_b


if __name__ == "__main__":
    key = jax.random.PRNGKey(0)
    k_params, k_x1, k_x2, k_params2, k_x3 = jax.random.split(key, 5)

    # --- case 1: narrow packing path (F*K = 32 <= 64), single-block grid ---
    embedding_dim, num_filters, kernel_sizes = 32, 16, (2, 3)
    dropout_rate = 0.5  # TODO(synk): dropout is inference-mode identity (no RNG mask)
    conv_ws, conv_bs, fc_w, fc_b = _make_params(k_params, embedding_dim, num_filters, kernel_sizes)
    x = jax.random.normal(k_x1, (4, embedding_dim), jnp.float32)
    out = jax.block_until_ready(
        cnn_text_forward(x, conv_ws, conv_bs, fc_w, fc_b, kernel_sizes))
    ref = cnn_text_reference(x, conv_ws, conv_bs, fc_w, fc_b, kernel_sizes)
    assert out.shape == (4, 1)
    assert bool(jnp.allclose(out, ref, atol=1e-2, rtol=1e-2)), (out, ref)

    # --- case 2: multi-step grid with ragged tail (batch not divisible by bm) ---
    x2 = jax.random.normal(k_x2, (20, embedding_dim), jnp.float32)
    out2 = jax.block_until_ready(
        cnn_text_forward(x2, conv_ws, conv_bs, fc_w, fc_b, kernel_sizes, block_m=8))
    ref2 = cnn_text_reference(x2, conv_ws, conv_bs, fc_w, fc_b, kernel_sizes)
    assert out2.shape == (20, 1)
    assert bool(jnp.allclose(out2, ref2, atol=1e-2, rtol=1e-2)), (out2, ref2)

    # --- case 3: wide (two-half) fallback packing path (F*K = 80 > 64) ---
    num_filters3 = 40
    conv_ws3, conv_bs3, fc_w3, fc_b3 = _make_params(
        k_params2, embedding_dim, num_filters3, kernel_sizes)
    x3 = jax.random.normal(k_x3, (4, embedding_dim), jnp.float32)
    out3 = jax.block_until_ready(
        cnn_text_forward(x3, conv_ws3, conv_bs3, fc_w3, fc_b3, kernel_sizes))
    ref3 = cnn_text_reference(x3, conv_ws3, conv_bs3, fc_w3, fc_b3, kernel_sizes)
    assert out3.shape == (4, 1)
    assert bool(jnp.allclose(out3, ref3, atol=1e-2, rtol=1e-2)), (out3, ref3)

    print("KERNEL_OK")
</pallas_src>

<mosaic_0001>
module attributes {stable_mosaic.version = 11 : i64} {
  func.func @_cnn_text_kernel(%arg0: i32, %arg1: memref<4x32xf32, #tpu.memory_space<vmem>>, %arg2: memref<32x128xbf16, #tpu.memory_space<vmem>>, %arg3: memref<1x128xf32, #tpu.memory_space<vmem>>, %arg4: memref<1x128xf32, #tpu.memory_space<vmem>>, %arg5: memref<1x1xf32, #tpu.memory_space<smem>>, %arg6: memref<4x1xf32, #tpu.memory_space<vmem>>) attributes {dimension_semantics = [#tpu.dimension_semantics<parallel>], iteration_bounds = array<i64: 1>, scalar_prefetch = 0 : i64, scratch_operands = 0 : i64, tpu.core_type = #tpu.core_type<tc>, window_params = [{transform_indices = @transform_0, window_bounds = array<i64: 4, 32>}, {pipeline_mode = #tpu.pipeline_mode<synchronous>, transform_indices = @transform_1, window_bounds = array<i64: 32, 128>}, {pipeline_mode = #tpu.pipeline_mode<synchronous>, transform_indices = @transform_2, window_bounds = array<i64: 1, 128>}, {pipeline_mode = #tpu.pipeline_mode<synchronous>, transform_indices = @transform_3, window_bounds = array<i64: 1, 128>}, {transform_indices = @transform_4, window_bounds = array<i64: 1, 1>}, {transform_indices = @transform_5, window_bounds = array<i64: 4, 1>}]} {
    %c0 = arith.constant 0 : index
    %c0_0 = arith.constant 0 : index
    %0 = vector.load %arg1[%c0, %c0_0] : memref<4x32xf32, #tpu.memory_space<vmem>>, vector<4x32xf32>
    %1 = arith.truncf %0 : vector<4x32xf32> to vector<4x32xbf16>
    %c0_1 = arith.constant 0 : index
    %c0_2 = arith.constant 0 : index
    %2 = vector.load %arg2[%c0_1, %c0_2] : memref<32x128xbf16, #tpu.memory_space<vmem>>, vector<32x128xbf16>
    %cst = arith.constant dense<0.000000e+00> : vector<4x128xf32>
    %3 = tpu.matmul %1, %2, %cst {dimension_numbers = #tpu.dot_dimension_numbers<[1], [0], [0], [1], [0, 0, 1, 1], [], []>} : vector<4x32xbf16>, vector<32x128xbf16>, vector<4x128xf32> -> vector<4x128xf32>
    %c0_3 = arith.constant 0 : index
    %c0_4 = arith.constant 0 : index
    %4 = vector.load %arg3[%c0_3, %c0_4] : memref<1x128xf32, #tpu.memory_space<vmem>>, vector<1x128xf32>
    %5 = vector.broadcast %4 : vector<1x128xf32> to vector<4x128xf32>
    %6 = arith.addf %3, %5 : vector<4x128xf32>
    %cst_5 = arith.constant 0.000000e+00 : f32
    %7 = vector.broadcast %cst_5 : f32 to vector<4x128xf32>
    %8 = arith.maximumf %6, %7 : vector<4x128xf32>
    %c64_i32 = arith.constant 64 : i32
    %9 = tpu.dynamic_rotate %8 by %c64_i32 dim 1 : vector<4x128xf32>, i32 -> vector<4x128xf32>
    %10 = arith.maximumf %8, %9 : vector<4x128xf32>
    %c0_6 = arith.constant 0 : index
    %c0_7 = arith.constant 0 : index
    %11 = vector.load %arg4[%c0_6, %c0_7] : memref<1x128xf32, #tpu.memory_space<vmem>>, vector<1x128xf32>
    %12 = vector.broadcast %11 : vector<1x128xf32> to vector<4x128xf32>
    %13 = arith.mulf %10, %12 : vector<4x128xf32>
    %cst_8 = arith.constant dense<0.000000e+00> : vector<4xf32>
    %14 = vector.multi_reduction <add>, %13, %cst_8 [1] : vector<4x128xf32> to vector<4xf32>
    %15 = vector.shape_cast %14 : vector<4xf32> to vector<4x1xf32>
    %c0_9 = arith.constant 0 : index
    %c0_10 = arith.constant 0 : index
    %16 = memref.load %arg5[%c0_9, %c0_10] : memref<1x1xf32, #tpu.memory_space<smem>>
    %17 = vector.broadcast %16 : f32 to vector<4x1xf32>
    %18 = arith.addf %15, %17 : vector<4x1xf32>
    %19 = arith.negf %18 : vector<4x1xf32>
    %20 = math.exp %19 : vector<4x1xf32>
    %cst_11 = arith.constant 1.000000e+00 : f32
    %21 = vector.broadcast %cst_11 : f32 to vector<4x1xf32>
    %22 = arith.addf %21, %20 : vector<4x1xf32>
    %23 = arith.divf %21, %22 : vector<4x1xf32>
    %c0_12 = arith.constant 0 : index
    %c0_13 = arith.constant 0 : index
    %24 = vector.load %arg6[%c0_12, %c0_13] : memref<4x1xf32, #tpu.memory_space<vmem>>, vector<4x1xf32>
    tpu.vector_store %arg6[%c0_12, %c0_13], %23 {strides = array<i32>} : memref<4x1xf32, #tpu.memory_space<vmem>>, vector<4x1xf32>,
    return
  }
  func.func @transform_0(%arg0: i32) -> (i32, i32) {
    %c0_i32 = arith.constant 0 : i32
    %c0_i32_0 = arith.constant 0 : i32
    return %arg0, %c0_i32 : i32, i32
  }
  func.func @transform_1(%arg0: i32) -> (i32, i32) {
    %c0_i32 = arith.constant 0 : i32
    %c0_i32_0 = arith.constant 0 : i32
    %c0_i32_1 = arith.constant 0 : i32
    return %c0_i32, %c0_i32_0 : i32, i32
  }
  func.func @transform_2(%arg0: i32) -> (i32, i32) {
    %c0_i32 = arith.constant 0 : i32
    %c0_i32_0 = arith.constant 0 : i32
    %c0_i32_1 = arith.constant 0 : i32
    return %c0_i32, %c0_i32_0 : i32, i32
  }
  func.func @transform_3(%arg0: i32) -> (i32, i32) {
    %c0_i32 = arith.constant 0 : i32
    %c0_i32_0 = arith.constant 0 : i32
    %c0_i32_1 = arith.constant 0 : i32
    return %c0_i32, %c0_i32_0 : i32, i32
  }
  func.func @transform_4(%arg0: i32) -> (i32, i32) {
    %c0_i32 = arith.constant 0 : i32
    %c0_i32_0 = arith.constant 0 : i32
    %c0_i32_1 = arith.constant 0 : i32
    return %c0_i32, %c0_i32_0 : i32, i32
  }
  func.func @transform_5(%arg0: i32) -> (i32, i32) {
    %c0_i32 = arith.constant 0 : i32
    %c0_i32_0 = arith.constant 0 : i32
    return %arg0, %c0_i32 : i32, i32
  }
}

</mosaic_0001>

<llo_original>
// kernel: tpu_custom_call.1
$region0: #{tpu_custom_call.1}
  #allocation0 [shape = 'u32[]', space=smem, size = 0x4, offset = 0x4, fixed_abs, tag = 'smem constant byte address 0x4 - core index']
  #allocation1 [shape = 'u32[144,128]{1,0:T(1,128)}', space=vmem, size = 0x12000, scoped, tag = 'internal scratch']
  #allocation2 [shape = 'f32[1,1]{1,0:T(1,128)S(6)}', space=smem, size = 0x200, scoped, tag = 'scoped memory for tpu_custom_call.1']
  %s0 = inlined_call_operand.hbm [shape: f32[4,32], index: 0, kind: input, shape index: {}]
  %s1 = inlined_call_operand.hbm [shape: bf16[32,128], index: 1, kind: input, shape index: {}]
  %s2 = inlined_call_operand.vmem [shape: f32[1,128], index: 2, kind: input, shape index: {}]
  %s3 = inlined_call_operand.vmem [shape: f32[1,128], index: 3, kind: input, shape index: {}]
  %s4 = inlined_call_operand.<no memory space> [shape: f32[1,1], index: 4, kind: input, shape index: {}]
  %s5 = inlined_call_operand.vmem [shape: f32[4,1], index: 5, kind: output, shape index: {}]
  %s6 = sld [smem:[#allocation0]]
  $region38: #{tpu_custom_call.1} parent=0
    _
  %s8 = ssub.s32 1, %s6
  %s9 = scalar_select 0, %s8, %s6
  %10 = sst [smem:[#allocation2]] %s4
  $region1: #{tpu_custom_call.1} parent=0
    #allocation3 [shape = 'u8[2048]{0}', space=vmem, size = 0x800, scoped, tag = 'input window, operand 0, single buffered']
    #allocation4 [shape = 's32[1]{0}', space=sflag, size = 0x4, scoped, tag = 'scoped memory for tpu_custom_call.1']
    #allocation5 [shape = 'u8[8192]{0}', space=vmem, size = 0x2000, scoped, tag = 'input window, operand 1, single buffered']
    #allocation6 [shape = 's32[1]{0}', space=sflag, size = 0x4, scoped, tag = 'scoped memory for tpu_custom_call.1']
    %11 = vsyncpa [#allocation4], 0
    %12 = vsyncpa [#allocation6], 0
    // Predicated region
    $region2: #{tpu_custom_call.1} parent=1 // pred_check
      _
    $region3: #{tpu_custom_call.1} parent=1 // pred_check_branch
      %14 = sbr.rel (0) target = $region5
    $region4: #{tpu_custom_call.1} parent=1 // pred_region
      %s16 = ssub.s32 64, 64
      %17 = vsyncadd [#allocation4], %s16
      %s19 = sshll.u32 [#allocation3], 4
      %s20 = int_to_ptr.vmem [resolvable:$true] %s19
      %22 = dma.hbm_to_vmem [thread:$0]  %s0, 64, %s20, [#allocation4]
    $region5: #{tpu_custom_call.1} parent=1 // pred_fallthru
      _
    // Predicated region
    $region6: #{tpu_custom_call.1} parent=1 // pred_check
      _
    $region7: #{tpu_custom_call.1} parent=1 // pred_check_branch
      %24 = sbr.rel (0) target = $region9
    $region8: #{tpu_custom_call.1} parent=1 // pred_region
      %s26 = ssub.s32 256, 256
      %27 = vsyncadd [#allocation6], %s26
      %s28 = sshll.u32 [#allocation5], 4
      %s29 = int_to_ptr.vmem [resolvable:$true] %s28
      %34 = dma.hbm_to_vmem [thread:$0]  %s1, 256, %s29, [#allocation6], 64, 64, 4
    $region9: #{tpu_custom_call.1} parent=1 // pred_fallthru
      _
    // Predicated region
    $region10: #{tpu_custom_call.1} parent=1 // pred_check
      _
    $region11: #{tpu_custom_call.1} parent=1 // pred_check_branch
      %36 = sbr.rel (0) target = $region13
    $region12: #{tpu_custom_call.1} parent=1 // pred_region
      _
    $region13: #{tpu_custom_call.1} parent=1 // pred_fallthru
      _
    // Predicated region
    $region14: #{tpu_custom_call.1} parent=1 // pred_check
      _
    $region15: #{tpu_custom_call.1} parent=1 // pred_check_branch
      %38 = sbr.rel (0) target = $region17
    $region16: #{tpu_custom_call.1} parent=1 // pred_region
      _
    $region17: #{tpu_custom_call.1} parent=1 // pred_fallthru
      _
    // Predicated region
    $region18: #{tpu_custom_call.1} parent=1 // pred_check
      _
    $region19: #{tpu_custom_call.1} parent=1 // pred_check_branch
      %40 = sbr.rel (0) target = $region21
    $region20: #{tpu_custom_call.1} parent=1 // pred_region
      _
    $region21: #{tpu_custom_call.1} parent=1 // pred_fallthru
      _
    // Predicated region
    $region22: #{tpu_custom_call.1} parent=1 // pred_check
      _
    $region23: #{tpu_custom_call.1} parent=1 // pred_check_branch
      %42 = sbr.rel (0) target = $region25
    $region24: #{tpu_custom_call.1} parent=1 // pred_region
      %43 = dma.done [#allocation4], 64
    $region25: #{tpu_custom_call.1} parent=1 // pred_fallthru
      _
    // Predicated region
    $region26: #{tpu_custom_call.1} parent=1 // pred_check
      _
    $region27: #{tpu_custom_call.1} parent=1 // pred_check_branch
      %45 = sbr.rel (0) target = $region29
    $region28: #{tpu_custom_call.1} parent=1 // pred_region
      %46 = dma.done [#allocation6], 256
    $region29: #{tpu_custom_call.1} parent=1 // pred_fallthru
      _
    %v48 = vld [vmem:[#allocation3] sm:$0xf]
    %v49 = vpack.c.bf16 %v48, %v48
    %v50 = vld [vmem:[#allocation5] sm:$0xf]
    %v51 = vld [vmem:[#allocation5 + $0x4] sm:$0xf]
    %v52 = vld [vmem:[#allocation5 + $0x8] sm:$0xf]
    %v53 = vld [vmem:[#allocation5 + $0xc] sm:$0xf]
    %v54 = vld [vmem:[%s2] sm:$0x1]
    %v56 = vlaneseq
    %v57 = vshrl.u32 %v56, 7
    %v58 = vsub.s32 0, %v57
    %v59 = vrot.slane %v54, %v58
    %v65 = vunpack.c.l.b16 %v50
    %v66 = vunpack.c.l.b16 %v51
    %v67 = vunpack.c.l.b16 %v52
    %v68 = vunpack.c.l.b16 %v53
    %v69 = vpack.c.b16 %v66, %v65
    %v70 = vpack.c.b16 %v68, %v67
    %vm73 = vcmask 261120
    %v75 = vsel %vm73, %v49, 0
    %77 = vmatprep.subr.bf16.mxu0 0
    %78 = vmatpush1.bf16.msra.mxu0 %v69
    %79 = vmatprep.subr.bf16.mxu0 0
    %80 = vmatpush1.bf16.msra.mxu0 %v70
    %81 = vmatprep.subr.bf16.mxu0 0
    %82 = vmatpush1.bf16.msra.mxu0 0
    %83 = vmatprep.subr.bf16.mxu0 0
    %84 = vmatpush1.bf16.msra.mxu0 0
    %85 = vmatprep.subr.bf16.mxu0 0
    %86 = vmatpush1.bf16.msra.mxu0 0
    %87 = vmatprep.subr.bf16.mxu0 0
    %88 = vmatpush1.bf16.msra.mxu0 0
    %89 = vmatprep.subr.bf16.mxu0 0
    %90 = vmatpush1.bf16.msra.mxu0 0
    %91 = vmatprep.subr.bf16.mxu0 0
    %92 = vmatpush1.bf16.msra.mxu0 0
    %93 = vmatprep.subr.bf16.mxu0 0
    %94 = vmatpush1.bf16.msra.mxu0 0
    %95 = vmatprep.subr.bf16.mxu0 0
    %96 = vmatpush1.bf16.msra.mxu0 0
    %97 = vmatprep.subr.bf16.mxu0 0
    %98 = vmatpush1.bf16.msra.mxu0 0
    %99 = vmatprep.subr.bf16.mxu0 0
    %100 = vmatpush1.bf16.msra.mxu0 0
    %101 = vmatprep.subr.bf16.mxu0 0
    %102 = vmatpush1.bf16.msra.mxu0 0
    %103 = vmatprep.subr.bf16.mxu0 0
    %104 = vmatpush1.bf16.msra.mxu0 0
    %105 = vmatprep.subr.bf16.mxu0 0
    %106 = vmatpush1.bf16.msra.mxu0 0
    %107 = vmatprep.subr.bf16.mxu0 0
    %108 = vmatpush1.bf16.msra.mxu0 0
    %109 = vmatprep.mubr.bf16.mxu0 0
    %110 = vmatmul.mubr.bf16.gmra.mrb[0].mxu0 %v75
    %v111 = vpop.f32.mrb[0].mxu0
    %v112 = vadd.f32 %v59, %v111
    %v113 = vpop.f32.mrb[0].mxu0
    %v114 = vpop.f32.mrb[0].mxu0
    %v115 = vpop.f32.mrb[0].mxu0
    %116 = vdwg.mxu0
    %v117 = vmax.f32 %v112, 0.0
    %118 = vrot.lane.b32.xlu0 %v117, 64
    %v119 = vpop.permute.xlu0 %118
    %v120 = vmax.f32 %v117, %v119
    %v121 = vld [vmem:[%s3] sm:$0x1]
    %v123 = vlaneseq
    %v124 = vshrl.u32 %v123, 7
    %v125 = vsub.s32 0, %v124
    %v126 = vrot.slane %v121, %v125
    %v128 = vmul.f32 %v120, %v126
    %vm129 = vcmask 1043456
    %v130 = vsel %vm129, %v128, 0.0
    %131 = vadd.xlane.f32.xlu0 %v130
    %v132 = vpop.xlane.xlu0 %131
    %s133 = sld [smem:[#allocation2]]
    %v134 = vstv %s133
    %v135 = vadd.f32 %v132, %v134
    %v136 = vxor.u32 %v135, 2147483648
    %v137 = vmul.f32 %v136, 1.442695
    %v138 = vpow.pop %v137
    %v139 = vadd.f32 %v138, 1.0
    %v140 = vrcp.pop %v139
    %v141 = vmul.f32 1.0, %v140
    %vm142 = vcmask 3072
    %143 = vst.msk [vmem:[%s5] sm:$0xf] %vm142, %v141
    // Predicated region
    $region30: #{tpu_custom_call.1} parent=1 // pred_check
      _
    $region31: #{tpu_custom_call.1} parent=1 // pred_check_branch
      %145 = sbr.rel (0) target = $region33
    $region32: #{tpu_custom_call.1} parent=1 // pred_region
      _
    $region33: #{tpu_custom_call.1} parent=1 // pred_fallthru
      _
    // Predicated region
    $region34: #{tpu_custom_call.1} parent=1 // pred_check
      _
    $region35: #{tpu_custom_call.1} parent=1 // pred_check_branch
      %147 = sbr.rel (0) target = $region37
    $region36: #{tpu_custom_call.1} parent=1 // pred_region
      _
    $region37: #{tpu_custom_call.1} parent=1 // pred_fallthru
      _
    %148 = vsyncpa [#allocation4], 1
    %149 = vsyncpa [#allocation6], 1

</llo_original>
